<compile_context>
chip_gen: v5e
topology: v5e:2x2
jax: 0.10.0
libtpu: 0.0.40
codegen_flags: <defaults>
</compile_context>

<pallas_src>
import numpy as np
import jax
import jax.numpy as jnp
from jax.experimental import pallas as pl
from jax.experimental.pallas import tpu as pltpu

F32 = jnp.float32
BF16 = jnp.bfloat16


# ---------------------------------------------------------------------------
# Kernel 1: xw1 = x @ W1   (row-tiled feature transform, bf16 MXU inputs)
# ---------------------------------------------------------------------------
def xw1_kernel(x_ref, w1_ref, out_ref):
    out_ref[...] = jnp.dot(x_ref[...], w1_ref[...],
                           preferred_element_type=F32).astype(out_ref.dtype)


# ---------------------------------------------------------------------------
# Kernel 2: block-sparse  h1 = A_hat @ xw1 + b1  fused with the z stage:
#   z = relu(h1) @ W2[:H] + zb      (zb = relu(x[root[batch]]) @ W2[H:], glue)
# Grid is 1-D over the nonzero (i,k) blocks of A_hat (scalar-prefetch tables).
# xw1 is fully resident in VMEM; the k block is sliced in-kernel.
# ---------------------------------------------------------------------------
def prop1_z_kernel(bi_ref, bk_ref, a_ref, xw_ref, b1_ref, zb_ref, w2a_ref,
                   z_ref, acc_ref):
    t = pl.program_id(0)
    nt = pl.num_programs(0)
    cur_i = bi_ref[t]
    prev_i = bi_ref[jnp.maximum(t - 1, 0)]
    next_i = bi_ref[jnp.minimum(t + 1, nt - 1)]
    is_first = jnp.logical_or(t == 0, prev_i != cur_i)
    is_last = jnp.logical_or(t == nt - 1, next_i != cur_i)

    @pl.when(is_first)
    def _():
        acc_ref[...] = jnp.zeros_like(acc_ref)

    tile = a_ref.shape[1]
    start = pl.multiple_of(bk_ref[t] * tile, tile)
    xw_blk = xw_ref[pl.ds(start, tile), :]                       # (tile, H) bf16
    acc_ref[...] += jnp.dot(a_ref[...], xw_blk, preferred_element_type=F32)

    @pl.when(is_last)
    def _():
        # TODO(synk): F.dropout treated as eval-mode identity (deterministic fwd).
        h1r = jnp.maximum(acc_ref[...] + b1_ref[...], 0.0).astype(BF16)
        z_ref[...] = (jnp.dot(h1r, w2a_ref[...], preferred_element_type=F32)
                      + zb_ref[...]).astype(z_ref.dtype)


# ---------------------------------------------------------------------------
# Kernel 3: block-sparse  h2 = relu(A_hat @ z + b2)  with fused scatter-mean
# pooling.  Emits one per-row-tile partial pool slab P[:, tile_i] @ h2_i; the
# nI partials are summed in XLA glue.  h2 never touches HBM.
# ---------------------------------------------------------------------------
def prop2_pool_kernel(bi_ref, bk_ref, a_ref, z_ref, b2_ref, p_ref,
                      out_ref, acc_ref):
    t = pl.program_id(0)
    nt = pl.num_programs(0)
    cur_i = bi_ref[t]
    prev_i = bi_ref[jnp.maximum(t - 1, 0)]
    next_i = bi_ref[jnp.minimum(t + 1, nt - 1)]
    is_first = jnp.logical_or(t == 0, prev_i != cur_i)
    is_last = jnp.logical_or(t == nt - 1, next_i != cur_i)

    @pl.when(is_first)
    def _():
        acc_ref[...] = jnp.zeros_like(acc_ref)

    tile = a_ref.shape[1]
    start = pl.multiple_of(bk_ref[t] * tile, tile)
    z_blk = z_ref[pl.ds(start, tile), :]                         # (tile, O) bf16
    acc_ref[...] += jnp.dot(a_ref[...], z_blk, preferred_element_type=F32)

    @pl.when(is_last)
    def _():
        h2 = jnp.maximum(acc_ref[...] + b2_ref[...], 0.0)        # (tile, O) f32
        out_ref[0] = jnp.dot(p_ref[...], h2, preferred_element_type=F32)


# ---------------------------------------------------------------------------
# Glue + wrapper
# ---------------------------------------------------------------------------
def build_gcn_adjacency(edge_index, num_nodes):
    """Dense PyG-style gcn_norm adjacency: D^-1/2 (A + I) D^-1/2."""
    src, dst = edge_index[0], edge_index[1]
    A = jnp.zeros((num_nodes, num_nodes), F32).at[dst, src].add(1.0)
    A = A + jnp.eye(num_nodes, dtype=F32)
    deg = A.sum(axis=1)
    dinv = jnp.where(deg > 0, jax.lax.rsqrt(deg), 0.0)
    return dinv[:, None] * A * dinv[None, :]


def _compiler_params(semantics, need_bytes):
    # Explicit scoped-VMEM budget (matters when xw1/z are pinned resident or
    # tile >= 1024); clamp to the v7x physical ceiling so it is safe everywhere.
    limit = int(min(max(2 * need_bytes, 32 * 1024 * 1024), 64 * 1024 * 1024))
    return pltpu.CompilerParams(dimension_semantics=semantics,
                                vmem_limit_bytes=limit)


def tdrumor_gcn_forward(x, edge_index, batch, root_index, params, *, tile=512):
    """TDrumorGCN forward (eval mode).  Returns (B, out_feats + hid_feats)."""
    x = x.astype(F32)
    N, Fin = x.shape
    W1, b1, W2, b2 = params
    H = W1.shape[1]
    O = W2.shape[1]
    B = root_index.shape[0]                 # static; no host sync on max(batch)+1
    Bp = max(8, -(-B // 8) * 8)             # pad graph axis to a sublane multiple

    # tile: multiple of 128, no larger than the 128-padded node count
    tile = max(128, (int(tile) // 128) * 128)
    tile = min(tile, -(-N // 128) * 128)
    Np = -(-N // tile) * tile
    pad_n = Np - N
    nI = Np // tile

    # --- dense normalized adjacency, zero-padded (glue) ---------------------
    A_hat = build_gcn_adjacency(edge_index, N)
    A_pad = jnp.pad(A_hat, ((0, pad_n), (0, pad_n)))
    x_bf = jnp.pad(x, ((0, pad_n), (0, 0))).astype(BF16)

    # --- block-sparsity structure (host side: grid size must be static) -----
    blk_mask = np.asarray(
        jnp.any(A_pad.reshape(nI, tile, nI, tile) != 0.0, axis=(1, 3)))
    bi_np, bk_np = np.nonzero(blk_mask)          # row-major: i-major, k-inner
    T = int(bi_np.shape[0])                      # number of nonzero blocks
    blk_i = jnp.asarray(bi_np, dtype=jnp.int32)
    blk_k = jnp.asarray(bk_np, dtype=jnp.int32)

    # --- scatter_mean pooling matrix, padded --------------------------------
    onehot_b = jax.nn.one_hot(batch, B, dtype=F32)                # (N, B)
    counts = jnp.maximum(onehot_b.sum(axis=0), 1.0)
    P = (onehot_b / counts[None, :]).T                            # (B, N)
    P_pad = jnp.zeros((Bp, Np), F32).at[:B, :N].set(P)

    # --- split conv2 weight; precompute root-extend contribution in glue ----
    W1b = W1.astype(BF16)
    W2a = W2[:H].astype(BF16)                                     # (H, O)
    W2b = W2[H:]                                                  # (Fin, O) f32
    b1_2d = b1.reshape(1, H).astype(F32)
    b2_2d = b2.reshape(1, O).astype(F32)

    # relu(root_extend) @ W2[H:]  == gather of B tiny per-graph rows
    zb = (jnp.maximum(x[root_index], 0.0) @ W2b)[batch]           # (N, O) f32
    zb_pad = jnp.pad(zb, ((0, pad_n), (0, 0)))

    # pooled root_extend_2 == h1[root_index]; tiny, full f32 in glue
    h1root = (A_hat[root_index] @ x) @ W1 + b1[None, :]           # (B, H)

    A_bf = A_pad.astype(BF16)

    # (1) xw1 = x @ W1
    need1 = 2 * tile * Fin * 2 + 2 * Fin * H * 2 + 2 * tile * H * 2
    xw1 = pl.pallas_call(
        xw1_kernel,
        grid=(nI,),
        in_specs=[pl.BlockSpec((tile, Fin), lambda i: (i, 0)),
                  pl.BlockSpec((Fin, H), lambda i: (0, 0))],
        out_specs=pl.BlockSpec((tile, H), lambda i: (i, 0)),
        out_shape=jax.ShapeDtypeStruct((Np, H), BF16),
        compiler_params=_compiler_params(("parallel",), need1),
    )(x_bf, W1b)

    # (2) block-sparse prop1 fused with the z stage (h1 never hits HBM)
    need2 = (2 * tile * tile * 2 + 2 * Np * H * 2 + 2 * tile * O * 4
             + 2 * tile * O * 2 + tile * H * 4 + 4 * H * (O + 2))
    z = pl.pallas_call(
        prop1_z_kernel,
        grid_spec=pltpu.PrefetchScalarGridSpec(
            num_scalar_prefetch=2,
            grid=(T,),
            in_specs=[
                pl.BlockSpec((tile, tile), lambda t, bi, bk: (bi[t], bk[t])),
                pl.BlockSpec((Np, H), lambda t, bi, bk: (0, 0)),   # xw1 resident
                pl.BlockSpec((1, H), lambda t, bi, bk: (0, 0)),
                pl.BlockSpec((tile, O), lambda t, bi, bk: (bi[t], 0)),
                pl.BlockSpec((H, O), lambda t, bi, bk: (0, 0)),
            ],
            out_specs=pl.BlockSpec((tile, O), lambda t, bi, bk: (bi[t], 0)),
            scratch_shapes=[pltpu.VMEM((tile, H), F32)],
        ),
        out_shape=jax.ShapeDtypeStruct((Np, O), BF16),
        compiler_params=_compiler_params(("arbitrary",), need2),
    )(blk_i, blk_k, A_bf, xw1, b1_2d, zb_pad, W2a)

    # (3) block-sparse prop2 + fused scatter-mean pooling (per-row-tile partials)
    need3 = (2 * tile * tile * 2 + 2 * Np * O * 2 + 2 * Bp * tile * 4
             + 2 * Bp * O * 4 + tile * O * 4 + 8 * O)
    pool_partials = pl.pallas_call(
        prop2_pool_kernel,
        grid_spec=pltpu.PrefetchScalarGridSpec(
            num_scalar_prefetch=2,
            grid=(T,),
            in_specs=[
                pl.BlockSpec((tile, tile), lambda t, bi, bk: (bi[t], bk[t])),
                pl.BlockSpec((Np, O), lambda t, bi, bk: (0, 0)),   # z resident
                pl.BlockSpec((1, O), lambda t, bi, bk: (0, 0)),
                pl.BlockSpec((Bp, tile), lambda t, bi, bk: (0, bi[t])),
            ],
            out_specs=pl.BlockSpec((1, Bp, O), lambda t, bi, bk: (bi[t], 0, 0)),
            scratch_shapes=[pltpu.VMEM((tile, O), F32)],
        ),
        out_shape=jax.ShapeDtypeStruct((nI, Bp, O), F32),
        compiler_params=_compiler_params(("arbitrary",), need3),
    )(blk_i, blk_k, A_bf, z, b2_2d, P_pad)

    pooled = pool_partials.sum(axis=0)[:B]                        # (B, O)
    return jnp.concatenate([pooled, h1root], axis=1)              # (B, O + H)


def reference_forward(x, edge_index, batch, root_index, params):
    """Pure-JAX f32 reference mirroring the torch forward (eval mode)."""
    W1, b1, W2, b2 = params
    N = x.shape[0]
    B = root_index.shape[0]
    A_hat = build_gcn_adjacency(edge_index, N)
    x1 = x.astype(F32)
    h1 = A_hat @ (x1 @ W1) + b1[None, :]
    re1 = x1[root_index[batch]]
    xc = jnp.maximum(jnp.concatenate([h1, re1], axis=1), 0.0)
    h2 = jnp.maximum(A_hat @ (xc @ W2) + b2[None, :], 0.0)
    re2 = h1[root_index[batch]]
    xf = jnp.concatenate([h2, re2], axis=1)
    onehot_b = jax.nn.one_hot(batch, B, dtype=F32)
    counts = jnp.maximum(onehot_b.sum(axis=0), 1.0)
    return (onehot_b / counts[None, :]).T @ xf


if __name__ == "__main__":
    key = jax.random.PRNGKey(0)
    in_feats, hid_feats, out_feats = 16, 32, 16
    num_graphs = 3
    nodes_per_graph = 100
    N = num_graphs * nodes_per_graph          # 300 nodes -> 3x3 blocks at tile=128

    k_x, k_w1, k_w2 = jax.random.split(key, 3)
    x = jax.random.normal(k_x, (N, in_feats), dtype=jnp.float32)

    # three star-shaped rumor trees (several all-zero adjacency blocks at tile=128)
    srcs, dsts, roots = [], [], []
    for g in range(num_graphs):
        root = g * nodes_per_graph
        roots.append(root)
        for c in range(root + 1, root + nodes_per_graph):
            srcs.append(root)
            dsts.append(c)
    edge_index = jnp.array([srcs, dsts], dtype=jnp.int32)                   # (2, E)
    batch = jnp.repeat(jnp.arange(num_graphs, dtype=jnp.int32), nodes_per_graph)
    root_index = jnp.array(roots, dtype=jnp.int32)                          # (B,)

    W1 = 0.1 * jax.random.normal(k_w1, (in_feats, hid_feats), dtype=jnp.float32)
    b1 = 0.01 * jnp.ones((hid_feats,), dtype=jnp.float32)
    W2 = 0.1 * jax.random.normal(k_w2, (hid_feats + in_feats, out_feats),
                                 dtype=jnp.float32)
    b2 = 0.01 * jnp.ones((out_feats,), dtype=jnp.float32)
    params = (W1, b1, W2, b2)

    ref = reference_forward(x, edge_index, batch, root_index, params)

    # tile=128 exercises the multi-block block-sparse path (+ padded last tile);
    # tile=512 exercises the default large-tile (clamped) path.
    for tl in (128, 512):
        out = tdrumor_gcn_forward(x, edge_index, batch, root_index, params, tile=tl)
        out = jax.block_until_ready(out)
        assert out.shape == (num_graphs, out_feats + hid_feats)
        max_err = float(jnp.max(jnp.abs(out - ref)))
        assert jnp.allclose(out, ref, rtol=3e-2, atol=3e-2), \
            f"tile={tl}: mismatch vs reference: {max_err}"

    print("KERNEL_OK")
</pallas_src>

<mosaic_0001>
module attributes {stable_mosaic.version = 11 : i64} {
  func.func @xw1_kernel(%arg0: i32, %arg1: memref<128x16xbf16, #tpu.memory_space<vmem>>, %arg2: memref<16x32xbf16, #tpu.memory_space<vmem>>, %arg3: memref<128x32xbf16, #tpu.memory_space<vmem>>) attributes {dimension_semantics = [#tpu.dimension_semantics<parallel>], iteration_bounds = array<i64: 3>, scalar_prefetch = 0 : i64, scratch_operands = 0 : i64, tpu.core_type = #tpu.core_type<tc>, window_params = [{transform_indices = @transform_0, window_bounds = array<i64: 128, 16>}, {pipeline_mode = #tpu.pipeline_mode<synchronous>, transform_indices = @transform_1, window_bounds = array<i64: 16, 32>}, {transform_indices = @transform_2, window_bounds = array<i64: 128, 32>}]} {
    %c0 = arith.constant 0 : index
    %c0_0 = arith.constant 0 : index
    %0 = vector.load %arg1[%c0, %c0_0] : memref<128x16xbf16, #tpu.memory_space<vmem>>, vector<128x16xbf16>
    %c0_1 = arith.constant 0 : index
    %c0_2 = arith.constant 0 : index
    %1 = vector.load %arg2[%c0_1, %c0_2] : memref<16x32xbf16, #tpu.memory_space<vmem>>, vector<16x32xbf16>
    %cst = arith.constant dense<0.000000e+00> : vector<128x32xf32>
    %2 = tpu.matmul %0, %1, %cst {dimension_numbers = #tpu.dot_dimension_numbers<[1], [0], [0], [1], [0, 0, 1, 1], [], []>} : vector<128x16xbf16>, vector<16x32xbf16>, vector<128x32xf32> -> vector<128x32xf32>
    %3 = arith.truncf %2 : vector<128x32xf32> to vector<128x32xbf16>
    %c0_3 = arith.constant 0 : index
    %c0_4 = arith.constant 0 : index
    %4 = vector.load %arg3[%c0_3, %c0_4] : memref<128x32xbf16, #tpu.memory_space<vmem>>, vector<128x32xbf16>
    tpu.vector_store %arg3[%c0_3, %c0_4], %3 {strides = array<i32>} : memref<128x32xbf16, #tpu.memory_space<vmem>>, vector<128x32xbf16>,
    return
  }
  func.func @transform_0(%arg0: i32) -> (i32, i32) {
    %c0_i32 = arith.constant 0 : i32
    %c0_i32_0 = arith.constant 0 : i32
    return %arg0, %c0_i32 : i32, i32
  }
  func.func @transform_1(%arg0: i32) -> (i32, i32) {
    %c0_i32 = arith.constant 0 : i32
    %c0_i32_0 = arith.constant 0 : i32
    %c0_i32_1 = arith.constant 0 : i32
    return %c0_i32, %c0_i32_0 : i32, i32
  }
  func.func @transform_2(%arg0: i32) -> (i32, i32) {
    %c0_i32 = arith.constant 0 : i32
    %c0_i32_0 = arith.constant 0 : i32
    return %arg0, %c0_i32 : i32, i32
  }
}

</mosaic_0001>

<llo_original>
// kernel: tpu_custom_call.1
$region0: #{tpu_custom_call.1}
  #allocation0 [shape = 'u32[]', space=smem, size = 0x4, offset = 0x4, fixed_abs, tag = 'smem constant byte address 0x4 - core index']
  #allocation1 [shape = 'u32[72,128]{1,0:T(1,128)}', space=vmem, size = 0x9000, scoped, tag = 'internal scratch']
  %s0 = inlined_call_operand.vmem [shape: bf16[384,16], index: 0, kind: input, shape index: {}]
  %s1 = inlined_call_operand.vmem [shape: bf16[16,32], index: 1, kind: input, shape index: {}]
  %s2 = inlined_call_operand.vmem [shape: bf16[384,32], index: 2, kind: output, shape index: {}]
  %s3 = sld [smem:[#allocation0]]
  $region41: #{tpu_custom_call.1} parent=0
    _
  %s5 = ssub.s32 1, %s3
  %s6 = scalar_select 0, %s5, %s3
  loop: start=0, step=1, limit=5
  $region2: #{tpu_custom_call.1} parent=0 // loop_pre_header
    _
  $region3: #{tpu_custom_call.1} parent=0 // loop_header
    %s8 = sphi 0, %s12
    %p9 = scmp.ge.s32.totalorder %s8, 5
    %s18 = sphi 0, %s20
    %s21 = sphi 0, %s18
    %s22 = sphi 0, %s21
    %s38 = sphi 0, %s22
    %s42 = sphi 0, %s42
    %s44 = sphi 0, %s42
    %s45 = sphi 0, %s44
    %s59 = sphi 0, %s45
    %s65 = sphi 0, %s67
    %s68 = sphi 0, %s65
    %s69 = sphi 0, %s68
    %s85 = sphi 0, %s69
  $region4: #{tpu_custom_call.1} parent=0 // loop_header_branch
    %11 = sbr.rel (%p9) target = $region8
  $region5: #{tpu_custom_call.1} parent=0 // loop_body
    %s13 = ssub.s32 %s8, 1
    %s14 = ssub.s32 %s8, 2
    %s15 = sadd.s32 %s8, 1
    %s16 = ssub.s32 %s8, %s15
    %p17 = scmp.eq.s32.totalorder %s16, 0
    %s19 = sadd.s32 %s18, 1
    %s20 = scalar_select %p17, %s18, %s19
    %p23 = pneg %p17
    %p24 = scmp.eq.s32.totalorder %s8, 2
    %p25 = por %p23, %p24
    %p26 = scmp.ne.s32.totalorder %s18, %s21
    %p27 = scmp.eq.s32.totalorder %s8, 0
    %p28 = por %p26, %p27
    %p29 = scmp.ne.s32.totalorder %s18, %s21
    %p30 = scmp.eq.s32.totalorder %s13, 2
    %p31 = por %p29, %p30
    %p32 = scmp.ne.s32.totalorder %s21, %s22
    %p33 = scmp.eq.s32.totalorder %s13, 0
    %p34 = por %p32, %p33
    %p35 = scmp.ne.s32.totalorder %s21, %s22
    %p36 = scmp.eq.s32.totalorder %s14, 2
    %p37 = por %p35, %p36
    %p39 = scmp.ne.s32.totalorder %s22, %s38
    %p40 = scmp.eq.s32.totalorder %s14, 0
    %p41 = por %p39, %p40
    %s43 = sadd.s32 %s42, 1
    %p46 = scmp.eq.s32.totalorder %s8, 2
    %p47 = scmp.ne.s32.totalorder %s42, %s44
    %p48 = scmp.eq.s32.totalorder %s8, 0
    %p49 = por %p47, %p48
    %p50 = scmp.ne.s32.totalorder %s42, %s44
    %p51 = scmp.eq.s32.totalorder %s13, 2
    %p52 = por %p50, %p51
    %p53 = scmp.ne.s32.totalorder %s44, %s45
    %p54 = scmp.eq.s32.totalorder %s13, 0
    %p55 = por %p53, %p54
    %p56 = scmp.ne.s32.totalorder %s44, %s45
    %p57 = scmp.eq.s32.totalorder %s14, 2
    %p58 = por %p56, %p57
    %p60 = scmp.ne.s32.totalorder %s45, %s59
    %p61 = scmp.eq.s32.totalorder %s14, 0
    %p62 = por %p60, %p61
    %s63 = ssub.s32 %s8, %s15
    %p64 = scmp.eq.s32.totalorder %s63, 0
    %s66 = sadd.s32 %s65, 1
    %s67 = scalar_select %p64, %s65, %s66
    %p70 = pneg %p64
    %p71 = scmp.eq.s32.totalorder %s8, 2
    %p72 = por %p70, %p71
    %p73 = scmp.ne.s32.totalorder %s65, %s68
    %p74 = scmp.eq.s32.totalorder %s8, 0
    %p75 = por %p73, %p74
    %p76 = scmp.ne.s32.totalorder %s65, %s68
    %p77 = scmp.eq.s32.totalorder %s13, 2
    %p78 = por %p76, %p77
    %p79 = scmp.ne.s32.totalorder %s68, %s69
    %p80 = scmp.eq.s32.totalorder %s13, 0
    %p81 = por %p79, %p80
    %p82 = scmp.ne.s32.totalorder %s68, %s69
    %p83 = scmp.eq.s32.totalorder %s14, 2
    %p84 = por %p82, %p83
    %p86 = scmp.ne.s32.totalorder %s69, %s85
    %p87 = scmp.eq.s32.totalorder %s14, 0
    %p88 = por %p86, %p87
    %p89 = scmp.le.s32.totalorder 1, %s8
    %p90 = scmp.lt.s32.totalorder %s8, 4
    %p91 = pnand %p89, %p90
    %p92 = pneg %p91
    // Predicated region
    $region9: #{tpu_custom_call.1} parent=5 // pred_check
      _
    $region10: #{tpu_custom_call.1} parent=5 // pred_check_branch
      %94 = sbr.rel (%p91) target = $region12
    $region11: #{tpu_custom_call.1} parent=5 // pred_region
      %s95 = ssub.s32 %s8, 1
      // Predicated region
      $region13: #{tpu_custom_call.1} parent=11 // pred_check
        %p96 = pneg %p55
      $region14: #{tpu_custom_call.1} parent=11 // pred_check_branch
        %98 = sbr.rel (%p96) target = $region16
      $region15: #{tpu_custom_call.1} parent=11 // pred_region
        _
      $region16: #{tpu_custom_call.1} parent=11 // pred_fallthru
        _
    $region12: #{tpu_custom_call.1} parent=5 // pred_fallthru
      _
    %p99 = scmp.lt.s32.totalorder %s8, 3
    // Predicated region
    $region17: #{tpu_custom_call.1} parent=5 // pred_check
      %p100 = pneg %p99
    $region18: #{tpu_custom_call.1} parent=5 // pred_check_branch
      %102 = sbr.rel (%p100) target = $region20
    $region19: #{tpu_custom_call.1} parent=5 // pred_region
      // Predicated region
      $region21: #{tpu_custom_call.1} parent=19 // pred_check
        %p103 = pneg %p28
      $region22: #{tpu_custom_call.1} parent=19 // pred_check_branch
        %105 = sbr.rel (%p103) target = $region24
      $region23: #{tpu_custom_call.1} parent=19 // pred_region
        %s106 = smul.u32 16, %s8
        %p107 = scmp.lt.s32.totalorder %s106, 47
        %s108 = scalar_select %p107, %s106, 47
        %s109 = smul.addr %s108, 4
        %s110 = scalar_lea.vmem %s0, %s109
        %s111 = smul.u32 16, %s8
      $region24: #{tpu_custom_call.1} parent=19 // pred_fallthru
        _
    $region20: #{tpu_custom_call.1} parent=5 // pred_fallthru
      _
    %p112 = scmp.le.s32.totalorder 1, %s8
    %p113 = scmp.lt.s32.totalorder %s8, 4
    %p114 = pnand %p112, %p113
    %p115 = pneg %p114
    // Predicated region
    $region25: #{tpu_custom_call.1} parent=5 // pred_check
      _
    $region26: #{tpu_custom_call.1} parent=5 // pred_check_branch
      %117 = sbr.rel (%p114) target = $region28
    $region27: #{tpu_custom_call.1} parent=5 // pred_region
      %s118 = ssub.s32 %s8, 1
      %s119 = smul.u32 16, %s13
      %p120 = scmp.lt.s32.totalorder %s119, 47
      %s121 = scalar_select %p120, %s119, 47
      %s122 = smul.addr %s121, 4
      %s123 = scalar_lea.vmem %s0, %s122
      %p124 = pneg %p34
      %p125 = pneg %p31
      %p126 = pneg %p55
      %p127 = pneg %p52
      %p128 = pneg %p81
      %p129 = pneg %p78
      %s130 = smul.u32 16, %s13
      %p131 = scmp.lt.s32.totalorder %s130, 47
      %s132 = scalar_select %p131, %s130, 47
      %s133 = smul.addr %s132, 4
      %s134 = scalar_lea.vmem %s2, %s133
      %s135 = smul.u32 16, %s13
      %p136 = scmp.lt.s32.totalorder %s135, 47
      %s137 = scalar_select %p136, %s135, 47
      %s138 = smul.addr %s137, 4
      %s139 = scalar_lea.vmem %s0, %s138
      %s140 = smul.u32 16, %s13
      %s141 = smul.u32 16, %s13
      %p142 = scmp.lt.s32.totalorder %s141, 47
      %s143 = scalar_select %p142, %s141, 47
      %s144 = smul.addr %s143, 4
      %s145 = scalar_lea.vmem %s2, %s144
      %s146 = smul.u32 16, %s13
      %v148 = vld [vmem:[%s139] sm:$0xf]
      %v149 = vld [vmem:[%s139 + $0x4] sm:$0xf]
      %v150 = vld [vmem:[%s139 + $0x8] sm:$0xf]
      %v151 = vld [vmem:[%s139 + $0xc] sm:$0xf]
      %v152 = vld [vmem:[%s139 + $0x10] sm:$0xf]
      %v153 = vld [vmem:[%s139 + $0x14] sm:$0xf]
      %v154 = vld [vmem:[%s139 + $0x18] sm:$0xf]
      %v155 = vld [vmem:[%s139 + $0x1c] sm:$0xf]
      %v156 = vld [vmem:[%s139 + $0x20] sm:$0xf]
      %v157 = vld [vmem:[%s139 + $0x24] sm:$0xf]
      %v158 = vld [vmem:[%s139 + $0x28] sm:$0xf]
      %v159 = vld [vmem:[%s139 + $0x2c] sm:$0xf]
      %v160 = vld [vmem:[%s139 + $0x30] sm:$0xf]
      %v161 = vld [vmem:[%s139 + $0x34] sm:$0xf]
      %v162 = vld [vmem:[%s139 + $0x38] sm:$0xf]
      %v163 = vld [vmem:[%s139 + $0x3c] sm:$0xf]
      %v164 = vld [vmem:[%s1] sm:$0xf]
      %v165 = vld [vmem:[%s1 + $0x4] sm:$0xf]
      %v182 = vunpack.c.l.b16 %v148
      %v183 = vunpack.c.l.b16 %v149
      %v184 = vunpack.c.l.b16 %v150
      %v185 = vunpack.c.l.b16 %v151
      %v186 = vunpack.c.l.b16 %v152
      %v187 = vunpack.c.l.b16 %v153
      %v188 = vunpack.c.l.b16 %v154
      %v189 = vunpack.c.l.b16 %v155
      %v190 = vunpack.c.l.b16 %v156
      %v191 = vunpack.c.l.b16 %v157
      %v192 = vunpack.c.l.b16 %v158
      %v193 = vunpack.c.l.b16 %v159
      %v194 = vunpack.c.l.b16 %v160
      %v195 = vunpack.c.l.b16 %v161
      %v196 = vunpack.c.l.b16 %v162
      %v197 = vunpack.c.l.b16 %v163
      %v198 = vpack.c.b16 %v183, %v182
      %v199 = vpack.c.b16 %v185, %v184
      %v200 = vpack.c.b16 %v187, %v186
      %v201 = vpack.c.b16 %v189, %v188
      %v202 = vpack.c.b16 %v191, %v190
      %v203 = vpack.c.b16 %v193, %v192
      %v204 = vpack.c.b16 %v195, %v194
      %v205 = vpack.c.b16 %v197, %v196
      %v208 = vunpack.c.l.b16 %v164
      %v209 = vunpack.c.l.b16 %v165
      %v210 = vpack.c.b16 %v209, %v208
      %vm212 = vcmask 130048
      %v214 = vsel %vm212, %v198, 0
      %v217 = vsel %vm212, %v199, 0
      %v220 = vsel %vm212, %v200, 0
      %v223 = vsel %vm212, %v201, 0
      %v226 = vsel %vm212, %v202, 0
      %v229 = vsel %vm212, %v203, 0
      %v232 = vsel %vm212, %v204, 0
      %v235 = vsel %vm212, %v205, 0
      %237 = vmatpush.bf16.msra.mxu0 0
      %238 = vmatpush.bf16.msra.mxu0 0
      %239 = vmatpush.bf16.msra.mxu0 0
      %240 = vmatpush.bf16.msra.mxu0 0
      %241 = vmatpush.bf16.msra.mxu0 0
      %242 = vmatpush.bf16.msra.mxu0 0
      %243 = vmatpush.bf16.msra.mxu0 0
      %244 = vmatpush.bf16.msra.mxu0 %v210
      %245 = vmatmul.bf16.gmra.mxu0 %v214
      %v246 = vpop.f32.mrf.mxu0
      %v247 = vadd.f32 0.0, %v246
      %v248 = vpop.f32.mrf.mxu0
      %v249 = vadd.f32 0.0, %v248
      %250 = vmatmul.bf16.gmra.mxu0 %v217
      %v251 = vpop.f32.mrf.mxu0
      %v252 = vadd.f32 0.0, %v251
      %v253 = vpop.f32.mrf.mxu0
      %v254 = vadd.f32 0.0, %v253
      %255 = vmatmul.bf16.gmra.mxu0 %v220
      %v256 = vpop.f32.mrf.mxu0
      %v257 = vadd.f32 0.0, %v256
      %v258 = vpop.f32.mrf.mxu0
      %v259 = vadd.f32 0.0, %v258
      %260 = vmatmul.bf16.gmra.mxu0 %v223
      %v261 = vpop.f32.mrf.mxu0
      %v262 = vadd.f32 0.0, %v261
      %v263 = vpop.f32.mrf.mxu0
      %v264 = vadd.f32 0.0, %v263
      %265 = vmatmul.bf16.gmra.mxu0 %v226
      %v266 = vpop.f32.mrf.mxu0
      %v267 = vadd.f32 0.0, %v266
      %v268 = vpop.f32.mrf.mxu0
      %v269 = vadd.f32 0.0, %v268
      %270 = vmatmul.bf16.gmra.mxu0 %v229
      %v271 = vpop.f32.mrf.mxu0
      %v272 = vadd.f32 0.0, %v271
      %v273 = vpop.f32.mrf.mxu0
      %v274 = vadd.f32 0.0, %v273
      %275 = vmatmul.bf16.gmra.mxu0 %v232
      %v276 = vpop.f32.mrf.mxu0
      %v277 = vadd.f32 0.0, %v276
      %v278 = vpop.f32.mrf.mxu0
      %v279 = vadd.f32 0.0, %v278
      %280 = vmatmul.bf16.gmra.mxu0 %v235
      %v281 = vpop.f32.mrf.mxu0
      %v282 = vadd.f32 0.0, %v281
      %v283 = vpop.f32.mrf.mxu0
      %v284 = vadd.f32 0.0, %v283
      %285 = vdwg.mxu0
      %v286 = vpack.c.bf16 %v247, %v247
      %v287 = vpack.c.bf16 %v249, %v249
      %v288 = vpack.c.bf16 %v252, %v252
      %v289 = vpack.c.bf16 %v254, %v254
      %v290 = vpack.c.bf16 %v257, %v257
      %v291 = vpack.c.bf16 %v259, %v259
      %v292 = vpack.c.bf16 %v262, %v262
      %v293 = vpack.c.bf16 %v264, %v264
      %v294 = vpack.c.bf16 %v267, %v267
      %v295 = vpack.c.bf16 %v269, %v269
      %v296 = vpack.c.bf16 %v272, %v272
      %v297 = vpack.c.bf16 %v274, %v274
      %v298 = vpack.c.bf16 %v277, %v277
      %v299 = vpack.c.bf16 %v279, %v279
      %v300 = vpack.c.bf16 %v282, %v282
      %v301 = vpack.c.bf16 %v284, %v284
      %vm302 = vcmask 257024
      %303 = vst.msk [vmem:[%s145] sm:$0xf] %vm302, %v286
      %304 = vst.msk [vmem:[%s145 + $0x4] sm:$0xf] %vm302, %v287
      %305 = vst.msk [vmem:[%s145 + $0x8] sm:$0xf] %vm302, %v288
      %306 = vst.msk [vmem:[%s145 + $0xc] sm:$0xf] %vm302, %v289
      %307 = vst.msk [vmem:[%s145 + $0x10] sm:$0xf] %vm302, %v290
      %308 = vst.msk [vmem:[%s145 + $0x14] sm:$0xf] %vm302, %v291
      %309 = vst.msk [vmem:[%s145 + $0x18] sm:$0xf] %vm302, %v292
      %310 = vst.msk [vmem:[%s145 + $0x1c] sm:$0xf] %vm302, %v293
      %311 = vst.msk [vmem:[%s145 + $0x20] sm:$0xf] %vm302, %v294
      %312 = vst.msk [vmem:[%s145 + $0x24] sm:$0xf] %vm302, %v295
      %313 = vst.msk [vmem:[%s145 + $0x28] sm:$0xf] %vm302, %v296
      %314 = vst.msk [vmem:[%s145 + $0x2c] sm:$0xf] %vm302, %v297
      %315 = vst.msk [vmem:[%s145 + $0x30] sm:$0xf] %vm302, %v298
      %316 = vst.msk [vmem:[%s145 + $0x34] sm:$0xf] %vm302, %v299
      %317 = vst.msk [vmem:[%s145 + $0x38] sm:$0xf] %vm302, %v300
      %318 = vst.msk [vmem:[%s145 + $0x3c] sm:$0xf] %vm302, %v301
      %s319 = smul.u32 16, %s13
      %p320 = scmp.lt.s32.totalorder %s319, 47
      %s321 = scalar_select %p320, %s319, 47
      %s322 = smul.addr %s321, 4
      %s323 = scalar_lea.vmem %s2, %s322
      // Predicated region
      $region29: #{tpu_custom_call.1} parent=27 // pred_check
        %p324 = pneg %p78
      $region30: #{tpu_custom_call.1} parent=27 // pred_check_branch
        %326 = sbr.rel (%p324) target = $region32
      $region31: #{tpu_custom_call.1} parent=27 // pred_region
        %s327 = smul.u32 16, %s13
      $region32: #{tpu_custom_call.1} parent=27 // pred_fallthru
        _
    $region28: #{tpu_custom_call.1} parent=5 // pred_fallthru
      _
    %p328 = scmp.le.s32.totalorder 2, %s8
    // Predicated region
    $region33: #{tpu_custom_call.1} parent=5 // pred_check
      %p329 = pneg %p328
    $region34: #{tpu_custom_call.1} parent=5 // pred_check_branch
      %331 = sbr.rel (%p329) target = $region36
    $region35: #{tpu_custom_call.1} parent=5 // pred_region
      %s332 = ssub.s32 %s8, 2
      // Predicated region
      $region37: #{tpu_custom_call.1} parent=35 // pred_check
        %p333 = pneg %p84
      $region38: #{tpu_custom_call.1} parent=35 // pred_check_branch
        %335 = sbr.rel (%p333) target = $region40
      $region39: #{tpu_custom_call.1} parent=35 // pred_region
        %s336 = smul.u32 16, %s14
        %p337 = scmp.lt.s32.totalorder %s336, 47
        %s338 = scalar_select %p337, %s336, 47
        %s339 = smul.addr %s338, 4
        %s340 = scalar_lea.vmem %s2, %s339
      $region40: #{tpu_custom_call.1} parent=35 // pred_fallthru
        _
    $region36: #{tpu_custom_call.1} parent=5 // pred_fallthru
      _
  $region6: #{tpu_custom_call.1} parent=0 // loop_footer
    %s12 = sadd.s32 1, %s8
  $region7: #{tpu_custom_call.1} parent=0 // loop_footer_branch
    %7 = sbr.rel target = $region3
  $region8: #{tpu_custom_call.1} parent=0 // loop_exit
    _

</llo_original>
